<compile_context>
chip_gen: v7x
topology: tpu7x:2x2x1
jax: 0.10.0
libtpu: 0.0.40
codegen_flags: <defaults>
</compile_context>

<pallas_src>
import numpy as np

import jax
import jax.numpy as jnp
from jax.experimental import pallas as pl
from jax.experimental.pallas import tpu as pltpu

EPS = 1e-5
_LANE = 128
_DEFAULT_VMEM_CAP = 64 * 1024 * 1024  # conservative fallback (v7x per-TC physical)


def _round_up(n, m):
    return ((n + m - 1) // m) * m


def _vmem_capacity_bytes():
    try:
        cap = int(pltpu.get_tpu_info().vmem_capacity_bytes)
        if cap > 0:
            return cap
    except Exception:
        pass
    return _DEFAULT_VMEM_CAP


def _vmem_limit_bytes():
    # Lift v5e's 16 MiB scoped default; stay well under physical VMEM
    # (128 MiB v5e/v6e -> 64 MiB; 64 MiB v7x -> 48 MiB).
    return min(64 * 1024 * 1024, (_vmem_capacity_bytes() * 3) // 4)


def _make_ln_kernel_bias(inv_h):
    def kernel(x_ref, w_ref, b_ref, o_ref):
        # x_ref: (block_rows, Hp); w_ref/b_ref: (1, Hp); o_ref: (block_rows, Hp)
        x = x_ref[...].astype(jnp.float32)
        # Fused single pass: sum and sum-of-squares together (padded lanes are
        # zero, so dividing by the TRUE H gives correct mean / E[x^2]).
        mean = jnp.sum(x, axis=-1, keepdims=True) * inv_h
        ex2 = jnp.sum(x * x, axis=-1, keepdims=True) * inv_h
        var = jnp.maximum(ex2 - mean * mean, 0.0)
        inv = jax.lax.rsqrt(var + EPS)  # EUP slot — free vs. the memory bottleneck
        w = w_ref[...].astype(jnp.float32)
        b = b_ref[...].astype(jnp.float32)
        o_ref[...] = ((x - mean) * inv * w + b).astype(o_ref.dtype)

    return kernel


def _make_ln_kernel_nobias(inv_h):
    def kernel(x_ref, w_ref, o_ref):
        x = x_ref[...].astype(jnp.float32)
        mean = jnp.sum(x, axis=-1, keepdims=True) * inv_h
        ex2 = jnp.sum(x * x, axis=-1, keepdims=True) * inv_h
        var = jnp.maximum(ex2 - mean * mean, 0.0)
        inv = jax.lax.rsqrt(var + EPS)
        o_ref[...] = ((x - mean) * inv * w_ref[...].astype(jnp.float32)).astype(o_ref.dtype)

    return kernel


def _pick_block_rows(R, Hp, dtype, requested):
    itemsize = np.dtype(dtype).itemsize
    # sublane packing: 8 rows for 32-bit, 16 for bf16/f16, 32 for 8-bit dtypes
    mult = max(8, 32 // itemsize)
    r_cap = _round_up(max(R, 1), mult)

    if requested is not None:
        return max(mult, min(_round_up(int(requested), mult), r_cap))

    vmem_cap = _vmem_capacity_bytes()
    tile_budget = (_vmem_limit_bytes() * 3) // 4  # headroom for compiler scratch

    # Per-row tile footprint:
    #   2x double-buffered input tile + 2x double-buffered output tile
    #   + f32 upcast of x + one f32 intermediate (counts the sub-32-bit upcast)
    per_row = Hp * (2 * itemsize + 2 * itemsize) + Hp * 2 * 4

    # Target input bytes per grid step: mem-bound, amortize ~0.35us/step.
    # Bigger on 128 MiB-VMEM generations (v5e/v6e), tighter on v7x.
    target_in_bytes = 8 * 1024 * 1024 if vmem_cap >= 96 * 1024 * 1024 else 4 * 1024 * 1024

    br_vmem = max(mult, (tile_budget // per_row) // mult * mult)
    br_target = max(mult, (target_in_bytes // (Hp * itemsize)) // mult * mult)
    br = min(br_vmem, br_target)

    # Keep at least a few grid steps so both v7x TensorCores get work
    # (harmless extra steps on single-core v5e/v6e).
    min_steps = 4
    br = min(br, max(mult, _round_up(-(-R // min_steps), mult)))

    return max(mult, min(br, r_cap))


def layer_norm(x, weight, bias=None, *, block_rows=None):
    """LayerNorm over the last dim of x, with optional bias (PyTorch LayerNorm)."""
    orig_shape = x.shape
    H = orig_shape[-1]
    assert weight.shape == (H,)
    if bias is not None:
        assert bias.shape == (H,)

    x2 = x.reshape(-1, H)
    R = x2.shape[0]

    # Lane-dense hidden: pad H to a multiple of 128 with zeros. Padded lanes
    # contribute nothing to the sums; we divide by the true H and slice off.
    Hp = _round_up(max(H, _LANE), _LANE)
    pad = Hp - H
    w2 = weight.reshape(1, H)
    b2 = bias.reshape(1, H) if bias is not None else None
    if pad:
        x2 = jnp.pad(x2, ((0, 0), (0, pad)))
        w2 = jnp.pad(w2, ((0, 0), (0, pad)))
        if b2 is not None:
            b2 = jnp.pad(b2, ((0, 0), (0, pad)))

    br = _pick_block_rows(R, Hp, x.dtype, block_rows)
    grid = (pl.cdiv(R, br),)  # ragged last block handled by Pallas masking

    itemsize = np.dtype(x.dtype).itemsize
    param_bytes = Hp * np.dtype(weight.dtype).itemsize * (2 if bias is not None else 1)
    cost = pl.CostEstimate(
        flops=8 * R * Hp,
        transcendentals=R,
        bytes_accessed=2 * R * Hp * itemsize + param_bytes,
    )

    x_spec = pl.BlockSpec((br, Hp), lambda i: (i, 0))
    p_spec = pl.BlockSpec((1, Hp), lambda i: (0, 0))
    o_spec = pl.BlockSpec((br, Hp), lambda i: (i, 0))
    cparams = pltpu.CompilerParams(
        dimension_semantics=("parallel",),
        vmem_limit_bytes=_vmem_limit_bytes(),
    )

    inv_h = 1.0 / float(H)
    out_shape = jax.ShapeDtypeStruct((R, Hp), x.dtype)

    if bias is not None:
        out = pl.pallas_call(
            _make_ln_kernel_bias(inv_h),
            out_shape=out_shape,
            grid_spec=pltpu.PrefetchScalarGridSpec(
                num_scalar_prefetch=0,
                grid=grid,
                in_specs=[x_spec, p_spec, p_spec],
                out_specs=o_spec,
            ),
            compiler_params=cparams,
            cost_estimate=cost,
        )(x2, w2, b2)
    else:
        out = pl.pallas_call(
            _make_ln_kernel_nobias(inv_h),
            out_shape=out_shape,
            grid_spec=pltpu.PrefetchScalarGridSpec(
                num_scalar_prefetch=0,
                grid=grid,
                in_specs=[x_spec, p_spec],
                out_specs=o_spec,
            ),
            compiler_params=cparams,
            cost_estimate=cost,
        )(x2, w2)

    if pad:
        out = out[:, :H]
    return out.reshape(orig_shape)


if __name__ == "__main__":
    key = jax.random.PRNGKey(0)
    k0, k1, k2 = jax.random.split(key, 3)

    B, T, H = 2, 8, 32  # batch=2, seq=8, hidden=32 (lane-sparse -> padded path)
    x = jax.random.normal(k0, (B, T, H), dtype=jnp.float32)

    # Deterministic params, matching nn.Parameter(torch.ones/zeros(ndim))
    weight = jnp.ones((H,), dtype=jnp.float32)
    bias = jnp.zeros((H,), dtype=jnp.float32)

    def ref_ln(x, w, b):
        xf = x.astype(jnp.float32)
        mean = jnp.mean(xf, axis=-1, keepdims=True)
        var = jnp.mean((xf - mean) ** 2, axis=-1, keepdims=True)
        y = (xf - mean) * jax.lax.rsqrt(var + EPS) * w.astype(jnp.float32)
        if b is not None:
            y = y + b.astype(jnp.float32)
        return y.astype(x.dtype)

    # bias=True path (padded H)
    y = jax.block_until_ready(layer_norm(x, weight, bias))
    assert jnp.allclose(y, ref_ln(x, weight, bias), atol=1e-5, rtol=1e-5), "bias path mismatch"

    # bias=False path (no zeros buffer DMA'd)
    y_nb = jax.block_until_ready(layer_norm(x, weight, None))
    assert jnp.allclose(y_nb, ref_ln(x, weight, None), atol=1e-5, rtol=1e-5), "no-bias path mismatch"

    # ragged row count with a small fixed tile (exercises cdiv last-block masking)
    x3 = jax.random.normal(k1, (3, 5, H), dtype=jnp.float32)
    y3 = jax.block_until_ready(layer_norm(x3, weight, bias, block_rows=8))
    assert jnp.allclose(y3, ref_ln(x3, weight, bias), atol=1e-5, rtol=1e-5), "ragged path mismatch"

    # lane-dense bf16 path (no padding, 16-row sublane packing, f32 math in-kernel)
    Hb = 256
    xb = jax.random.normal(k2, (4, 16, Hb), dtype=jnp.bfloat16)
    wb = jnp.ones((Hb,), dtype=jnp.bfloat16)
    bb = jnp.zeros((Hb,), dtype=jnp.bfloat16)
    yb = jax.block_until_ready(layer_norm(xb, wb, bb))
    assert jnp.allclose(
        yb.astype(jnp.float32), ref_ln(xb, wb, bb).astype(jnp.float32), atol=2e-2, rtol=2e-2
    ), "bf16 path mismatch"

    print("KERNEL_OK")
</pallas_src>

<mosaic_0001>
module attributes {stable_mosaic.version = 11 : i64} {
  func.func @kernel(%arg0: i32, %arg1: memref<8x128xf32, #tpu.memory_space<vmem>>, %arg2: memref<1x128xf32, #tpu.memory_space<vmem>>, %arg3: memref<1x128xf32, #tpu.memory_space<vmem>>, %arg4: memref<8x128xf32, #tpu.memory_space<vmem>>) attributes {dimension_semantics = [#tpu.dimension_semantics<parallel>], iteration_bounds = array<i64: 2>, scalar_prefetch = 0 : i64, scratch_operands = 0 : i64, tpu.core_type = #tpu.core_type<tc>, window_params = [{transform_indices = @transform_0, window_bounds = array<i64: 8, 128>}, {pipeline_mode = #tpu.pipeline_mode<synchronous>, transform_indices = @transform_1, window_bounds = array<i64: 1, 128>}, {pipeline_mode = #tpu.pipeline_mode<synchronous>, transform_indices = @transform_2, window_bounds = array<i64: 1, 128>}, {transform_indices = @transform_3, window_bounds = array<i64: 8, 128>}]} {
    %c0 = arith.constant 0 : index
    %c0_0 = arith.constant 0 : index
    %0 = vector.load %arg1[%c0, %c0_0] : memref<8x128xf32, #tpu.memory_space<vmem>>, vector<8x128xf32>
    %cst = arith.constant dense<0.000000e+00> : vector<8xf32>
    %1 = vector.multi_reduction <add>, %0, %cst [1] : vector<8x128xf32> to vector<8xf32>
    %2 = vector.shape_cast %1 : vector<8xf32> to vector<8x1xf32>
    %cst_1 = arith.constant 3.125000e-02 : f32
    %3 = vector.broadcast %cst_1 : f32 to vector<8x1xf32>
    %4 = arith.mulf %2, %3 : vector<8x1xf32>
    %5 = arith.mulf %0, %0 : vector<8x128xf32>
    %cst_2 = arith.constant dense<0.000000e+00> : vector<8xf32>
    %6 = vector.multi_reduction <add>, %5, %cst_2 [1] : vector<8x128xf32> to vector<8xf32>
    %7 = vector.shape_cast %6 : vector<8xf32> to vector<8x1xf32>
    %cst_3 = arith.constant 3.125000e-02 : f32
    %8 = vector.broadcast %cst_3 : f32 to vector<8x1xf32>
    %9 = arith.mulf %7, %8 : vector<8x1xf32>
    %10 = arith.mulf %4, %4 : vector<8x1xf32>
    %11 = arith.subf %9, %10 : vector<8x1xf32>
    %cst_4 = arith.constant 0.000000e+00 : f32
    %12 = vector.broadcast %cst_4 : f32 to vector<8x1xf32>
    %13 = arith.maximumf %11, %12 : vector<8x1xf32>
    %cst_5 = arith.constant 9.99999974E-6 : f32
    %14 = vector.broadcast %cst_5 : f32 to vector<8x1xf32>
    %15 = arith.addf %13, %14 : vector<8x1xf32>
    %16 = math.rsqrt %15 : vector<8x1xf32>
    %c0_6 = arith.constant 0 : index
    %c0_7 = arith.constant 0 : index
    %17 = vector.load %arg2[%c0_6, %c0_7] : memref<1x128xf32, #tpu.memory_space<vmem>>, vector<1x128xf32>
    %c0_8 = arith.constant 0 : index
    %c0_9 = arith.constant 0 : index
    %18 = vector.load %arg3[%c0_8, %c0_9] : memref<1x128xf32, #tpu.memory_space<vmem>>, vector<1x128xf32>
    %19 = vector.broadcast %4 : vector<8x1xf32> to vector<8x128xf32>
    %20 = arith.subf %0, %19 : vector<8x128xf32>
    %21 = vector.broadcast %16 : vector<8x1xf32> to vector<8x128xf32>
    %22 = arith.mulf %20, %21 : vector<8x128xf32>
    %23 = vector.broadcast %17 : vector<1x128xf32> to vector<8x128xf32>
    %24 = arith.mulf %22, %23 : vector<8x128xf32>
    %25 = vector.broadcast %18 : vector<1x128xf32> to vector<8x128xf32>
    %26 = arith.addf %24, %25 : vector<8x128xf32>
    %c0_10 = arith.constant 0 : index
    %c0_11 = arith.constant 0 : index
    %27 = vector.load %arg4[%c0_10, %c0_11] : memref<8x128xf32, #tpu.memory_space<vmem>>, vector<8x128xf32>
    tpu.vector_store %arg4[%c0_10, %c0_11], %26 {strides = array<i32>} : memref<8x128xf32, #tpu.memory_space<vmem>>, vector<8x128xf32>,
    return
  }
  func.func @transform_0(%arg0: i32) -> (i32, i32) {
    %c0_i32 = arith.constant 0 : i32
    %c0_i32_0 = arith.constant 0 : i32
    return %arg0, %c0_i32 : i32, i32
  }
  func.func @transform_1(%arg0: i32) -> (i32, i32) {
    %c0_i32 = arith.constant 0 : i32
    %c0_i32_0 = arith.constant 0 : i32
    %c0_i32_1 = arith.constant 0 : i32
    return %c0_i32, %c0_i32_0 : i32, i32
  }
  func.func @transform_2(%arg0: i32) -> (i32, i32) {
    %c0_i32 = arith.constant 0 : i32
    %c0_i32_0 = arith.constant 0 : i32
    %c0_i32_1 = arith.constant 0 : i32
    return %c0_i32, %c0_i32_0 : i32, i32
  }
  func.func @transform_3(%arg0: i32) -> (i32, i32) {
    %c0_i32 = arith.constant 0 : i32
    %c0_i32_0 = arith.constant 0 : i32
    return %arg0, %c0_i32 : i32, i32
  }
}

</mosaic_0001>

<llo_original>
// kernel: tpu_custom_call.1
$region0: #{tpu_custom_call.1}
  #allocation0 [shape = 'u32[]', space=smem, size = 0x4, offset = 0x4, fixed_abs, tag = 'smem constant byte address 0x4 - core index']
  #allocation1 [shape = 'u32[144,128]{1,0:T(1,128)}', space=vmem, size = 0x12000, scoped, tag = 'internal scratch']
  %s0 = inlined_call_operand.hbm [shape: f32[16,128], index: 0, kind: input, shape index: {}]
  %s1 = inlined_call_operand.vmem [shape: f32[1,128], index: 1, kind: input, shape index: {}]
  %s2 = inlined_call_operand.vmem [shape: f32[1,128], index: 2, kind: input, shape index: {}]
  %s3 = inlined_call_operand.hbm [shape: f32[16,128], index: 3, kind: output, shape index: {}]
  %s4 = sld [smem:[#allocation0]]
  $region49: #{tpu_custom_call.1} parent=0
    _
  %s6 = ssub.s32 1, %s4
  %s7 = scalar_select 0, %s6, %s4
  $region1: #{tpu_custom_call.1} parent=0
    #allocation2 [shape = 'u8[8192]{0}', space=vmem, size = 0x2000, scoped, tag = 'input window, operand 0']
    #allocation3 [shape = 's32[2]{0}', space=sflag, size = 0x8, scoped, tag = 'scoped memory for tpu_custom_call.1']
    #allocation4 [shape = 's32[2]{0}', space=sflag, size = 0x8, scoped, tag = 'scoped memory for tpu_custom_call.1']
    #allocation5 [shape = 'u8[8192]{0}', space=vmem, size = 0x2000, scoped, tag = 'output window, operand 0']
    %8 = vsyncpa [#allocation3], 0
    %s9 = scalar_lea.sflag [#allocation3], 1
    %10 = vsyncpa %s9, 0
    %11 = vsyncpa [#allocation4], 0
    %s12 = scalar_lea.sflag [#allocation4], 1
    %13 = vsyncpa %s12, 0
    loop: start=0, step=1, limit=4
    $region2: #{tpu_custom_call.1} parent=1 // loop_pre_header
      _
    $region3: #{tpu_custom_call.1} parent=1 // loop_header
      %s15 = sphi 0, %s19
      %p16 = scmp.ge.s32.totalorder %s15, 4
      %s25 = sphi 0, %s27
      %s28 = sphi 0, %s25
      %s29 = sphi 0, %s28
      %s45 = sphi 0, %s29
      %s49 = sphi 0, %s49
      %s51 = sphi 0, %s49
      %s52 = sphi 0, %s51
      %s66 = sphi 0, %s52
      %s70 = sphi 0, %s70
      %s72 = sphi 0, %s70
      %s73 = sphi 0, %s72
      %s87 = sphi 0, %s73
      %s93 = sphi 0, %s95
      %s96 = sphi 0, %s93
      %s97 = sphi 0, %s96
      %s113 = sphi 0, %s97
    $region4: #{tpu_custom_call.1} parent=1 // loop_header_branch
      %18 = sbr.rel (%p16) target = $region8
    $region5: #{tpu_custom_call.1} parent=1 // loop_body
      %s20 = ssub.s32 %s15, 1
      %s21 = ssub.s32 %s15, 2
      %s22 = sadd.s32 %s15, 1
      %s23 = ssub.s32 %s15, %s22
      %p24 = scmp.eq.s32.totalorder %s23, 0
      %s26 = sadd.s32 %s25, 1
      %s27 = scalar_select %p24, %s25, %s26
      %p30 = pneg %p24
      %p31 = scmp.eq.s32.totalorder %s15, 1
      %p32 = por %p30, %p31
      %p33 = scmp.ne.s32.totalorder %s25, %s28
      %p34 = scmp.eq.s32.totalorder %s15, 0
      %p35 = por %p33, %p34
      %p36 = scmp.ne.s32.totalorder %s25, %s28
      %p37 = scmp.eq.s32.totalorder %s20, 1
      %p38 = por %p36, %p37
      %p39 = scmp.ne.s32.totalorder %s28, %s29
      %p40 = scmp.eq.s32.totalorder %s20, 0
      %p41 = por %p39, %p40
      %p42 = scmp.ne.s32.totalorder %s28, %s29
      %p43 = scmp.eq.s32.totalorder %s21, 1
      %p44 = por %p42, %p43
      %p46 = scmp.ne.s32.totalorder %s29, %s45
      %p47 = scmp.eq.s32.totalorder %s21, 0
      %p48 = por %p46, %p47
      %s50 = sadd.s32 %s49, 1
      %p53 = scmp.eq.s32.totalorder %s15, 1
      %p54 = scmp.ne.s32.totalorder %s49, %s51
      %p55 = scmp.eq.s32.totalorder %s15, 0
      %p56 = por %p54, %p55
      %p57 = scmp.ne.s32.totalorder %s49, %s51
      %p58 = scmp.eq.s32.totalorder %s20, 1
      %p59 = por %p57, %p58
      %p60 = scmp.ne.s32.totalorder %s51, %s52
      %p61 = scmp.eq.s32.totalorder %s20, 0
      %p62 = por %p60, %p61
      %p63 = scmp.ne.s32.totalorder %s51, %s52
      %p64 = scmp.eq.s32.totalorder %s21, 1
      %p65 = por %p63, %p64
      %p67 = scmp.ne.s32.totalorder %s52, %s66
      %p68 = scmp.eq.s32.totalorder %s21, 0
      %p69 = por %p67, %p68
      %s71 = sadd.s32 %s70, 1
      %p74 = scmp.eq.s32.totalorder %s15, 1
      %p75 = scmp.ne.s32.totalorder %s70, %s72
      %p76 = scmp.eq.s32.totalorder %s15, 0
      %p77 = por %p75, %p76
      %p78 = scmp.ne.s32.totalorder %s70, %s72
      %p79 = scmp.eq.s32.totalorder %s20, 1
      %p80 = por %p78, %p79
      %p81 = scmp.ne.s32.totalorder %s72, %s73
      %p82 = scmp.eq.s32.totalorder %s20, 0
      %p83 = por %p81, %p82
      %p84 = scmp.ne.s32.totalorder %s72, %s73
      %p85 = scmp.eq.s32.totalorder %s21, 1
      %p86 = por %p84, %p85
      %p88 = scmp.ne.s32.totalorder %s73, %s87
      %p89 = scmp.eq.s32.totalorder %s21, 0
      %p90 = por %p88, %p89
      %s91 = ssub.s32 %s15, %s22
      %p92 = scmp.eq.s32.totalorder %s91, 0
      %s94 = sadd.s32 %s93, 1
      %s95 = scalar_select %p92, %s93, %s94
      %p98 = pneg %p92
      %p99 = scmp.eq.s32.totalorder %s15, 1
      %p100 = por %p98, %p99
      %p101 = scmp.ne.s32.totalorder %s93, %s96
      %p102 = scmp.eq.s32.totalorder %s15, 0
      %p103 = por %p101, %p102
      %p104 = scmp.ne.s32.totalorder %s93, %s96
      %p105 = scmp.eq.s32.totalorder %s20, 1
      %p106 = por %p104, %p105
      %p107 = scmp.ne.s32.totalorder %s96, %s97
      %p108 = scmp.eq.s32.totalorder %s20, 0
      %p109 = por %p107, %p108
      %p110 = scmp.ne.s32.totalorder %s96, %s97
      %p111 = scmp.eq.s32.totalorder %s21, 1
      %p112 = por %p110, %p111
      %p114 = scmp.ne.s32.totalorder %s97, %s113
      %p115 = scmp.eq.s32.totalorder %s21, 0
      %p116 = por %p114, %p115
      %p117 = scmp.le.s32.totalorder 1, %s15
      %p118 = scmp.lt.s32.totalorder %s15, 3
      %p119 = pnand %p117, %p118
      %p120 = pneg %p119
      // Predicated region
      $region9: #{tpu_custom_call.1} parent=5 // pred_check
        _
      $region10: #{tpu_custom_call.1} parent=5 // pred_check_branch
        %122 = sbr.rel (%p119) target = $region12
      $region11: #{tpu_custom_call.1} parent=5 // pred_region
        %s123 = ssub.s32 %s15, 1
        // Predicated region
        $region13: #{tpu_custom_call.1} parent=11 // pred_check
          %p124 = pneg %p62
        $region14: #{tpu_custom_call.1} parent=11 // pred_check_branch
          %126 = sbr.rel (%p124) target = $region16
        $region15: #{tpu_custom_call.1} parent=11 // pred_region
          _
        $region16: #{tpu_custom_call.1} parent=11 // pred_fallthru
          _
        // Predicated region
        $region17: #{tpu_custom_call.1} parent=11 // pred_check
          %p127 = pneg %p83
        $region18: #{tpu_custom_call.1} parent=11 // pred_check_branch
          %129 = sbr.rel (%p127) target = $region20
        $region19: #{tpu_custom_call.1} parent=11 // pred_region
          _
        $region20: #{tpu_custom_call.1} parent=11 // pred_fallthru
          _
      $region12: #{tpu_custom_call.1} parent=5 // pred_fallthru
        _
      %p130 = scmp.lt.s32.totalorder %s15, 2
      // Predicated region
      $region21: #{tpu_custom_call.1} parent=5 // pred_check
        %p131 = pneg %p130
      $region22: #{tpu_custom_call.1} parent=5 // pred_check_branch
        %133 = sbr.rel (%p131) target = $region24
      $region23: #{tpu_custom_call.1} parent=5 // pred_region
        // Predicated region
        $region25: #{tpu_custom_call.1} parent=23 // pred_check
          %p134 = pneg %p35
        $region26: #{tpu_custom_call.1} parent=23 // pred_check_branch
          %136 = sbr.rel (%p134) target = $region28
        $region27: #{tpu_custom_call.1} parent=23 // pred_region
          %s137 = sand.u32 %s25, 1
          %s138 = scalar_lea.sflag [#allocation3], %s137
          %s139 = sand.u32 %s25, 1
          %s140 = smul.addr %s139, 8
          %s141 = scalar_lea.vmem [#allocation2], %s140
          %s143 = ssub.s32 128, 128
          %144 = vsyncadd %s138, %s143
          %s145 = smul.addr %s15, 128
          %s146 = scalar_lea.hbm %s0, %s145
          %s148 = sshll.u32 %s141, 4
          %s149 = int_to_ptr.vmem [resolvable:$true] %s148
          %151 = dma.hbm_to_vmem [thread:$0]  %s146, 128, %s149, %s138
        $region28: #{tpu_custom_call.1} parent=23 // pred_fallthru
          _
      $region24: #{tpu_custom_call.1} parent=5 // pred_fallthru
        _
      %p152 = scmp.le.s32.totalorder 1, %s15
      %p153 = scmp.lt.s32.totalorder %s15, 3
      %p154 = pnand %p152, %p153
      %p155 = pneg %p154
      // Predicated region
      $region29: #{tpu_custom_call.1} parent=5 // pred_check
        _
      $region30: #{tpu_custom_call.1} parent=5 // pred_check_branch
        %157 = sbr.rel (%p154) target = $region32
      $region31: #{tpu_custom_call.1} parent=5 // pred_region
        %s158 = ssub.s32 %s15, 1
        %s159 = sand.u32 %s28, 1
        %s160 = scalar_lea.sflag [#allocation3], %s159
        %s161 = sand.u32 %s28, 1
        %s162 = smul.addr %s161, 8
        %s163 = scalar_lea.vmem [#allocation2], %s162
        // Predicated region
        $region33: #{tpu_custom_call.1} parent=31 // pred_check
          %p164 = pneg %p41
        $region34: #{tpu_custom_call.1} parent=31 // pred_check_branch
          %166 = sbr.rel (%p164) target = $region36
        $region35: #{tpu_custom_call.1} parent=31 // pred_region
          %167 = dma.done %s160, 128
        $region36: #{tpu_custom_call.1} parent=31 // pred_fallthru
          _
        %s168 = sand.u32 %s28, 1
        %s169 = scalar_lea.sflag [#allocation3], %s168
        %s170 = sand.u32 %s28, 1
        %s171 = smul.addr %s170, 8
        %s172 = scalar_lea.vmem [#allocation2], %s171
        %p173 = pneg %p41
        %p174 = pneg %p38
        %p175 = pneg %p62
        %p176 = pneg %p59
        %p177 = pneg %p83
        %p178 = pneg %p80
        %p179 = pneg %p109
        %p180 = pneg %p106
        %s181 = sand.u32 %s96, 1
        %s182 = scalar_lea.sflag [#allocation4], %s181
        %s183 = sand.u32 %s96, 1
        %s184 = smul.addr %s183, 8
        %s185 = scalar_lea.vmem [#allocation5], %s184
        %v186 = vld [vmem:[%s163] sm:$0xff]
        %187 = vadd.xlane.f32.xlu0 %v186
        %v188 = vpop.xlane.xlu0 %187
        %v189 = vmul.f32 %v188, 0.03125
        %v190 = vmul.f32 %v186, %v186
        %191 = vadd.xlane.f32.xlu0 %v190
        %v192 = vpop.xlane.xlu0 %191
        %v193 = vmul.f32 %v192, 0.03125
        %v194 = vmul.f32 %v189, %v189
        %v195 = vsub.f32 %v193, %v194
        %v196 = vmax.f32 %v195, 0.0
        %v197 = vadd.f32 %v196, 1e-05
        %v198 = vrsqrt.pop %v197
        %v199 = vld [vmem:[%s1] sm:$0x1]
        %v200 = vld [vmem:[%s2] sm:$0x1]
        %v201 = vsub.f32 %v186, %v189
        %v202 = vmul.f32 %v201, %v198
        %v204 = vlaneseq
        %v205 = vshrl.u32 %v204, 7
        %v206 = vsub.s32 0, %v205
        %v207 = vrot.slane %v199, %v206
        %v209 = vmul.f32 %v202, %v207
        %v211 = vlaneseq
        %v212 = vshrl.u32 %v211, 7
        %v213 = vsub.s32 0, %v212
        %v214 = vrot.slane %v200, %v213
        %v216 = vadd.f32 %v209, %v214
        %217 = vst [vmem:[%s185] sm:$0xff] %v216
        %s218 = sand.u32 %s96, 1
        %s219 = scalar_lea.sflag [#allocation4], %s218
        %s220 = sand.u32 %s96, 1
        %s221 = smul.addr %s220, 8
        %s222 = scalar_lea.vmem [#allocation5], %s221
        // Predicated region
        $region37: #{tpu_custom_call.1} parent=31 // pred_check
          %p223 = pneg %p106
        $region38: #{tpu_custom_call.1} parent=31 // pred_check_branch
          %225 = sbr.rel (%p223) target = $region40
        $region39: #{tpu_custom_call.1} parent=31 // pred_region
          %s227 = ssub.s32 128, 128
          %228 = vsyncadd %s219, %s227
          %s229 = smul.addr %s20, 128
          %s230 = scalar_lea.hbm %s3, %s229
          %s232 = sshll.u32 %s222, 4
          %s233 = int_to_ptr.vmem [resolvable:$true] %s232
          %235 = dma.vmem_to_hbm [thread:$0]  %s233, 128, %s230, %s219
        $region40: #{tpu_custom_call.1} parent=31 // pred_fallthru
          _
      $region32: #{tpu_custom_call.1} parent=5 // pred_fallthru
        _
      %p236 = scmp.le.s32.totalorder 2, %s15
      // Predicated region
      $region41: #{tpu_custom_call.1} parent=5 // pred_check
        %p237 = pneg %p236
      $region42: #{tpu_custom_call.1} parent=5 // pred_check_branch
        %239 = sbr.rel (%p237) target = $region44
      $region43: #{tpu_custom_call.1} parent=5 // pred_region
        %s240 = ssub.s32 %s15, 2
        // Predicated region
        $region45: #{tpu_custom_call.1} parent=43 // pred_check
          %p241 = pneg %p112
        $region46: #{tpu_custom_call.1} parent=43 // pred_check_branch
          %243 = sbr.rel (%p241) target = $region48
        $region47: #{tpu_custom_call.1} parent=43 // pred_region
          %s244 = sand.u32 %s97, 1
          %s245 = scalar_lea.sflag [#allocation4], %s244
          %s246 = sand.u32 %s97, 1
          %s247 = smul.addr %s246, 8
          %s248 = scalar_lea.vmem [#allocation5], %s247
          %249 = dma.done %s245, 128
        $region48: #{tpu_custom_call.1} parent=43 // pred_fallthru
          _
      $region44: #{tpu_custom_call.1} parent=5 // pred_fallthru
        _
    $region6: #{tpu_custom_call.1} parent=1 // loop_footer
      %s19 = sadd.s32 1, %s15
    $region7: #{tpu_custom_call.1} parent=1 // loop_footer_branch
      %14 = sbr.rel target = $region3
    $region8: #{tpu_custom_call.1} parent=1 // loop_exit
      _
    %250 = vsyncpa [#allocation3], 1
    %s251 = scalar_lea.sflag [#allocation3], 1
    %252 = vsyncpa %s251, 1
    %253 = vsyncpa [#allocation4], 1
    %s254 = scalar_lea.sflag [#allocation4], 1
    %255 = vsyncpa %s254, 1

</llo_original>
